<compile_context>
chip_gen: v6e
topology: v6e:2x2x1
jax: 0.10.0
libtpu: 0.0.40
codegen_flags: <defaults>
</compile_context>

<pallas_src>
import jax
import jax.numpy as jnp
from jax.experimental import pallas as pl
from jax.experimental.pallas import tpu as pltpu


def _resize_kernel(x_ref, sh_ref, swt_ref, o_ref):
    # x_ref  : (B, H_in, W_in)   B contiguous planes (sublane-packed, no copy)
    # sh_ref : (H_out, H_in)     one-hot row selector (grid-invariant)
    # swt_ref: (W_in, W_out)     one-hot column selector, pre-transposed
    # o_ref  : (B, H_out, W_out)
    B = x_ref.shape[0]
    x = x_ref[...]

    sh_b = jnp.broadcast_to(sh_ref[...], (B,) + sh_ref.shape)     # (B,H_out,H_in)
    swt_b = jnp.broadcast_to(swt_ref[...], (B,) + swt_ref.shape)  # (B,W_in,W_out)

    # Row (H) selection: (B,H_out,H_in) @ (B,H_in,W_in) -> (B,H_out,W_in)
    t = jax.lax.dot_general(
        sh_b, x, (((2,), (1,)), ((0,), (0,))),
        preferred_element_type=jnp.float32)
    t = t.astype(x.dtype)  # one-hot selection -> lossless round trip

    # Column (W) selection: (B,H_out,W_in) @ (B,W_in,W_out) -> (B,H_out,W_out)
    out = jax.lax.dot_general(
        t, swt_b, (((2,), (1,)), ((0,), (0,))),
        preferred_element_type=jnp.float32)
    o_ref[...] = out.astype(o_ref.dtype)


def _vmem_params():
    """Per-chip VMEM sizing (conservative v7x defaults if the query fails)."""
    vmem = 64 * 1024 * 1024
    try:
        info = pltpu.get_tpu_info()
        v = getattr(info, "vmem_capacity_bytes", None)
        if v:
            vmem = int(v)
    except Exception:
        pass
    # Per-grid-step working-set budget (tiles are double-buffered; counted below).
    work_budget = max(4 * 1024 * 1024, min(vmem // 4, 24 * 1024 * 1024))
    # Scoped VMEM limit: ~3/4 of physical (96 MiB on v5e/v6e, 48 MiB on v7x).
    vmem_limit = max(32 * 1024 * 1024, (vmem * 3) // 4)
    vmem_limit = min(vmem_limit, (vmem * 3) // 4)
    return work_budget, vmem_limit


def _choose_block(nc, h_in, w_in, h_out, w_out, itemsize, work_budget, min_grid=2):
    """Largest divisor of nc whose per-step working set fits the budget."""
    per_b = ((2 * h_in * w_in + 2 * h_out * w_out) * itemsize          # double-buffered I/O tiles
             + (h_out * h_in + w_in * w_out) * itemsize                # broadcast selectors
             + (h_out * w_in + h_out * w_out) * (4 + itemsize))        # f32 intermediates + casts
    best = 1
    for b in range(1, nc + 1):
        if nc % b:
            continue
        if b * per_b <= work_budget and nc // b >= min_grid:
            best = b
    return best
    # NOTE: if nc is prime / awkward this degrades to B=1 (correct, many small
    # steps).  TODO(synk): pad NC to a friendlier multiple for such shapes.


def resize_nearest(x, target_size):
    """x: (N, C, H_in, W_in) -> (N, C, H_out, W_out), nearest (PyTorch semantics)."""
    N, C, H_in, W_in = x.shape
    if isinstance(target_size, int):
        target_size = (target_size, target_size)
    if len(target_size) == 1:
        target_size = (target_size[0], target_size[0])
    H_out, W_out = target_size

    dt = x.dtype
    if jnp.issubdtype(dt, jnp.integer):
        # v7x MXU has no integer support; route through f32 (exact for |v| < 2**24,
        # which covers uint8/int8/int16 image data).
        return resize_nearest(x.astype(jnp.float32), target_size).astype(dt)

    NC = N * C
    itemsize = jnp.dtype(dt).itemsize

    work_budget, vmem_limit = _vmem_params()
    B = _choose_block(NC, H_in, W_in, H_out, W_out, itemsize, work_budget,
                      min_grid=2 if NC >= 2 else 1)
    G = NC // B

    # PyTorch 'nearest': src_index = floor(dst_index * in / out)
    h_idx = (jnp.arange(H_out) * H_in) // H_out
    w_idx = (jnp.arange(W_out) * W_in) // W_out
    s_h = jax.nn.one_hot(h_idx, H_in, dtype=dt)        # (H_out, H_in)
    s_w_t = jax.nn.one_hot(w_idx, W_in, dtype=dt).T    # (W_in, W_out)

    # Pure (copy-free) reshape: (N, C, H, W) -> (G, B, H, W)
    x_r = x.reshape(G, B, H_in, W_in)

    out_r = pl.pallas_call(
        _resize_kernel,
        out_shape=jax.ShapeDtypeStruct((G, B, H_out, W_out), dt),
        grid_spec=pltpu.PrefetchScalarGridSpec(
            num_scalar_prefetch=0,
            grid=(G,),
            in_specs=[
                pl.BlockSpec((pl.Squeezed(), B, H_in, W_in),
                             lambda g: (g, 0, 0, 0)),
                pl.BlockSpec((H_out, H_in), lambda g: (0, 0)),    # grid-invariant
                pl.BlockSpec((W_in, W_out), lambda g: (0, 0)),    # grid-invariant
            ],
            out_specs=pl.BlockSpec((pl.Squeezed(), B, H_out, W_out),
                                   lambda g: (g, 0, 0, 0)),
        ),
        compiler_params=pltpu.CompilerParams(
            dimension_semantics=("parallel",),
            vmem_limit_bytes=int(vmem_limit),
        ),
    )(x_r, s_h, s_w_t)

    # Pure (copy-free) reshape back.
    return out_r.reshape(N, C, H_out, W_out)


def _nearest_ref(x, target_size):
    H_in, W_in = x.shape[-2:]
    h_idx = (jnp.arange(target_size[0]) * H_in) // target_size[0]
    w_idx = (jnp.arange(target_size[1]) * W_in) // target_size[1]
    return x[:, :, h_idx, :][:, :, :, w_idx]


if __name__ == "__main__":
    key = jax.random.PRNGKey(0)
    N, C, H_in, W_in = 2, 4, 16, 16
    x = jax.random.normal(key, (N, C, H_in, W_in), dtype=jnp.float32)

    # Downsample: Resize(8, 8)
    target_down = (8, 8)
    out_down = jax.block_until_ready(resize_nearest(x, target_down))
    ref_down = _nearest_ref(x, target_down)
    assert out_down.shape == (N, C, *target_down)
    assert out_down.dtype == x.dtype
    assert jnp.allclose(out_down, ref_down, atol=1e-6), "mismatch (downsample)"

    # Upsample: Resize(32, 32)
    target_up = (32, 32)
    out_up = jax.block_until_ready(resize_nearest(x, target_up))
    ref_up = _nearest_ref(x, target_up)
    assert out_up.shape == (N, C, *target_up)
    assert out_up.dtype == x.dtype
    assert jnp.allclose(out_up, ref_up, atol=1e-6), "mismatch (upsample)"

    print("KERNEL_OK")
</pallas_src>

<mosaic_0001>
module attributes {stable_mosaic.version = 11 : i64} {
  func.func @_resize_kernel(%arg0: i32, %arg1: memref<1x4x16x16xf32, #tpu.memory_space<vmem>>, %arg2: memref<8x16xf32, #tpu.memory_space<vmem>>, %arg3: memref<16x8xf32, #tpu.memory_space<vmem>>, %arg4: memref<1x4x8x8xf32, #tpu.memory_space<vmem>>) attributes {dimension_semantics = [#tpu.dimension_semantics<parallel>], iteration_bounds = array<i64: 2>, scalar_prefetch = 0 : i64, scratch_operands = 0 : i64, tpu.core_type = #tpu.core_type<tc>, window_params = [{transform_indices = @transform_0, window_bounds = array<i64: 1, 4, 16, 16>}, {pipeline_mode = #tpu.pipeline_mode<synchronous>, transform_indices = @transform_1, window_bounds = array<i64: 8, 16>}, {pipeline_mode = #tpu.pipeline_mode<synchronous>, transform_indices = @transform_2, window_bounds = array<i64: 16, 8>}, {transform_indices = @transform_3, window_bounds = array<i64: 1, 4, 8, 8>}]} {
    %c0 = arith.constant 0 : index
    %c0_0 = arith.constant 0 : index
    %c0_1 = arith.constant 0 : index
    %c0_2 = arith.constant 0 : index
    %0 = vector.load %arg1[%c0, %c0_0, %c0_1, %c0_2] : memref<1x4x16x16xf32, #tpu.memory_space<vmem>>, vector<1x4x16x16xf32>
    %1 = vector.shape_cast %0 : vector<1x4x16x16xf32> to vector<4x16x16xf32>
    %c0_3 = arith.constant 0 : index
    %c0_4 = arith.constant 0 : index
    %2 = vector.load %arg2[%c0_3, %c0_4] : memref<8x16xf32, #tpu.memory_space<vmem>>, vector<8x16xf32>
    %3 = vector.shape_cast %2 : vector<8x16xf32> to vector<1x8x16xf32>
    %4 = vector.broadcast %3 : vector<1x8x16xf32> to vector<4x8x16xf32>
    %c0_5 = arith.constant 0 : index
    %c0_6 = arith.constant 0 : index
    %5 = vector.load %arg3[%c0_5, %c0_6] : memref<16x8xf32, #tpu.memory_space<vmem>>, vector<16x8xf32>
    %6 = vector.shape_cast %5 : vector<16x8xf32> to vector<1x16x8xf32>
    %7 = vector.broadcast %6 : vector<1x16x8xf32> to vector<4x16x8xf32>
    %cst = arith.constant dense<0.000000e+00> : vector<4x8x16xf32>
    %8 = tpu.matmul %4, %1, %cst {dimension_numbers = #tpu.dot_dimension_numbers<[2], [1], [1], [2], [0, 0, 0, 1, 1, 2], [0], [0]>} : vector<4x8x16xf32>, vector<4x16x16xf32>, vector<4x8x16xf32> -> vector<4x8x16xf32>
    %cst_7 = arith.constant dense<0.000000e+00> : vector<4x8x8xf32>
    %9 = tpu.matmul %8, %7, %cst_7 {dimension_numbers = #tpu.dot_dimension_numbers<[2], [1], [1], [2], [0, 0, 0, 1, 1, 2], [0], [0]>} : vector<4x8x16xf32>, vector<4x16x8xf32>, vector<4x8x8xf32> -> vector<4x8x8xf32>
    %c0_8 = arith.constant 0 : index
    %c0_9 = arith.constant 0 : index
    %c0_10 = arith.constant 0 : index
    %c0_11 = arith.constant 0 : index
    %10 = vector.load %arg4[%c0_8, %c0_9, %c0_10, %c0_11] : memref<1x4x8x8xf32, #tpu.memory_space<vmem>>, vector<1x4x8x8xf32>
    %11 = vector.shape_cast %10 : vector<1x4x8x8xf32> to vector<4x8x8xf32>
    %12 = vector.shape_cast %9 : vector<4x8x8xf32> to vector<1x4x8x8xf32>
    tpu.vector_store %arg4[%c0_8, %c0_9, %c0_10, %c0_11], %12 {strides = array<i32>} : memref<1x4x8x8xf32, #tpu.memory_space<vmem>>, vector<1x4x8x8xf32>,
    return
  }
  func.func @transform_0(%arg0: i32) -> (i32, i32, i32, i32) {
    %c0_i32 = arith.constant 0 : i32
    %c0_i32_0 = arith.constant 0 : i32
    %c0_i32_1 = arith.constant 0 : i32
    %c0_i32_2 = arith.constant 0 : i32
    return %arg0, %c0_i32, %c0_i32_0, %c0_i32_1 : i32, i32, i32, i32
  }
  func.func @transform_1(%arg0: i32) -> (i32, i32) {
    %c0_i32 = arith.constant 0 : i32
    %c0_i32_0 = arith.constant 0 : i32
    %c0_i32_1 = arith.constant 0 : i32
    return %c0_i32, %c0_i32_0 : i32, i32
  }
  func.func @transform_2(%arg0: i32) -> (i32, i32) {
    %c0_i32 = arith.constant 0 : i32
    %c0_i32_0 = arith.constant 0 : i32
    %c0_i32_1 = arith.constant 0 : i32
    return %c0_i32, %c0_i32_0 : i32, i32
  }
  func.func @transform_3(%arg0: i32) -> (i32, i32, i32, i32) {
    %c0_i32 = arith.constant 0 : i32
    %c0_i32_0 = arith.constant 0 : i32
    %c0_i32_1 = arith.constant 0 : i32
    %c0_i32_2 = arith.constant 0 : i32
    return %arg0, %c0_i32, %c0_i32_0, %c0_i32_1 : i32, i32, i32, i32
  }
}

</mosaic_0001>

<llo_original>
// kernel: tpu_custom_call.1
$region0: #{tpu_custom_call.1}
  #allocation0 [shape = 'u32[]', space=smem, size = 0x4, offset = 0x4, fixed_abs, tag = 'smem constant byte address 0x4 - core index']
  #allocation1 [shape = 'u32[144,128]{1,0:T(1,128)}', space=vmem, size = 0x12000, scoped, tag = 'internal scratch']
  %s0 = inlined_call_operand.hbm [shape: f32[2,4,16,16], index: 0, kind: input, shape index: {}]
  %s1 = inlined_call_operand.vmem [shape: f32[8,16], index: 1, kind: input, shape index: {}]
  %s2 = inlined_call_operand.vmem [shape: f32[16,8], index: 2, kind: input, shape index: {}]
  %s3 = inlined_call_operand.hbm [shape: f32[2,4,8,8], index: 3, kind: output, shape index: {}]
  %s4 = sld [smem:[#allocation0]]
  $region49: #{tpu_custom_call.1} parent=0
    _
  %s6 = ssub.s32 1, %s4
  %s7 = scalar_select 0, %s6, %s4
  $region1: #{tpu_custom_call.1} parent=0
    #allocation2 [shape = 'u8[65536]{0}', space=vmem, size = 0x10000, scoped, tag = 'input window, operand 0']
    #allocation3 [shape = 's32[2]{0}', space=sflag, size = 0x8, scoped, tag = 'scoped memory for tpu_custom_call.1']
    #allocation4 [shape = 's32[2]{0}', space=sflag, size = 0x8, scoped, tag = 'scoped memory for tpu_custom_call.1']
    #allocation5 [shape = 'u8[32768]{0}', space=vmem, size = 0x8000, scoped, tag = 'output window, operand 0']
    %8 = vsyncpa [#allocation3], 0
    %s9 = scalar_lea.sflag [#allocation3], 1
    %10 = vsyncpa %s9, 0
    %11 = vsyncpa [#allocation4], 0
    %s12 = scalar_lea.sflag [#allocation4], 1
    %13 = vsyncpa %s12, 0
    loop: start=0, step=1, limit=4
    $region2: #{tpu_custom_call.1} parent=1 // loop_pre_header
      _
    $region3: #{tpu_custom_call.1} parent=1 // loop_header
      %s15 = sphi 0, %s19
      %p16 = scmp.ge.s32.totalorder %s15, 4
      %s25 = sphi 0, %s27
      %s28 = sphi 0, %s25
      %s29 = sphi 0, %s28
      %s45 = sphi 0, %s29
      %s49 = sphi 0, %s49
      %s51 = sphi 0, %s49
      %s52 = sphi 0, %s51
      %s66 = sphi 0, %s52
      %s70 = sphi 0, %s70
      %s72 = sphi 0, %s70
      %s73 = sphi 0, %s72
      %s87 = sphi 0, %s73
      %s93 = sphi 0, %s95
      %s96 = sphi 0, %s93
      %s97 = sphi 0, %s96
      %s113 = sphi 0, %s97
    $region4: #{tpu_custom_call.1} parent=1 // loop_header_branch
      %18 = sbr.rel (%p16) target = $region8
    $region5: #{tpu_custom_call.1} parent=1 // loop_body
      %s20 = ssub.s32 %s15, 1
      %s21 = ssub.s32 %s15, 2
      %s22 = sadd.s32 %s15, 1
      %s23 = ssub.s32 %s15, %s22
      %p24 = scmp.eq.s32.totalorder %s23, 0
      %s26 = sadd.s32 %s25, 1
      %s27 = scalar_select %p24, %s25, %s26
      %p30 = pneg %p24
      %p31 = scmp.eq.s32.totalorder %s15, 1
      %p32 = por %p30, %p31
      %p33 = scmp.ne.s32.totalorder %s25, %s28
      %p34 = scmp.eq.s32.totalorder %s15, 0
      %p35 = por %p33, %p34
      %p36 = scmp.ne.s32.totalorder %s25, %s28
      %p37 = scmp.eq.s32.totalorder %s20, 1
      %p38 = por %p36, %p37
      %p39 = scmp.ne.s32.totalorder %s28, %s29
      %p40 = scmp.eq.s32.totalorder %s20, 0
      %p41 = por %p39, %p40
      %p42 = scmp.ne.s32.totalorder %s28, %s29
      %p43 = scmp.eq.s32.totalorder %s21, 1
      %p44 = por %p42, %p43
      %p46 = scmp.ne.s32.totalorder %s29, %s45
      %p47 = scmp.eq.s32.totalorder %s21, 0
      %p48 = por %p46, %p47
      %s50 = sadd.s32 %s49, 1
      %p53 = scmp.eq.s32.totalorder %s15, 1
      %p54 = scmp.ne.s32.totalorder %s49, %s51
      %p55 = scmp.eq.s32.totalorder %s15, 0
      %p56 = por %p54, %p55
      %p57 = scmp.ne.s32.totalorder %s49, %s51
      %p58 = scmp.eq.s32.totalorder %s20, 1
      %p59 = por %p57, %p58
      %p60 = scmp.ne.s32.totalorder %s51, %s52
      %p61 = scmp.eq.s32.totalorder %s20, 0
      %p62 = por %p60, %p61
      %p63 = scmp.ne.s32.totalorder %s51, %s52
      %p64 = scmp.eq.s32.totalorder %s21, 1
      %p65 = por %p63, %p64
      %p67 = scmp.ne.s32.totalorder %s52, %s66
      %p68 = scmp.eq.s32.totalorder %s21, 0
      %p69 = por %p67, %p68
      %s71 = sadd.s32 %s70, 1
      %p74 = scmp.eq.s32.totalorder %s15, 1
      %p75 = scmp.ne.s32.totalorder %s70, %s72
      %p76 = scmp.eq.s32.totalorder %s15, 0
      %p77 = por %p75, %p76
      %p78 = scmp.ne.s32.totalorder %s70, %s72
      %p79 = scmp.eq.s32.totalorder %s20, 1
      %p80 = por %p78, %p79
      %p81 = scmp.ne.s32.totalorder %s72, %s73
      %p82 = scmp.eq.s32.totalorder %s20, 0
      %p83 = por %p81, %p82
      %p84 = scmp.ne.s32.totalorder %s72, %s73
      %p85 = scmp.eq.s32.totalorder %s21, 1
      %p86 = por %p84, %p85
      %p88 = scmp.ne.s32.totalorder %s73, %s87
      %p89 = scmp.eq.s32.totalorder %s21, 0
      %p90 = por %p88, %p89
      %s91 = ssub.s32 %s15, %s22
      %p92 = scmp.eq.s32.totalorder %s91, 0
      %s94 = sadd.s32 %s93, 1
      %s95 = scalar_select %p92, %s93, %s94
      %p98 = pneg %p92
      %p99 = scmp.eq.s32.totalorder %s15, 1
      %p100 = por %p98, %p99
      %p101 = scmp.ne.s32.totalorder %s93, %s96
      %p102 = scmp.eq.s32.totalorder %s15, 0
      %p103 = por %p101, %p102
      %p104 = scmp.ne.s32.totalorder %s93, %s96
      %p105 = scmp.eq.s32.totalorder %s20, 1
      %p106 = por %p104, %p105
      %p107 = scmp.ne.s32.totalorder %s96, %s97
      %p108 = scmp.eq.s32.totalorder %s20, 0
      %p109 = por %p107, %p108
      %p110 = scmp.ne.s32.totalorder %s96, %s97
      %p111 = scmp.eq.s32.totalorder %s21, 1
      %p112 = por %p110, %p111
      %p114 = scmp.ne.s32.totalorder %s97, %s113
      %p115 = scmp.eq.s32.totalorder %s21, 0
      %p116 = por %p114, %p115
      %p117 = scmp.le.s32.totalorder 1, %s15
      %p118 = scmp.lt.s32.totalorder %s15, 3
      %p119 = pnand %p117, %p118
      %p120 = pneg %p119
      // Predicated region
      $region9: #{tpu_custom_call.1} parent=5 // pred_check
        _
      $region10: #{tpu_custom_call.1} parent=5 // pred_check_branch
        %122 = sbr.rel (%p119) target = $region12
      $region11: #{tpu_custom_call.1} parent=5 // pred_region
        %s123 = ssub.s32 %s15, 1
        // Predicated region
        $region13: #{tpu_custom_call.1} parent=11 // pred_check
          %p124 = pneg %p62
        $region14: #{tpu_custom_call.1} parent=11 // pred_check_branch
          %126 = sbr.rel (%p124) target = $region16
        $region15: #{tpu_custom_call.1} parent=11 // pred_region
          _
        $region16: #{tpu_custom_call.1} parent=11 // pred_fallthru
          _
        // Predicated region
        $region17: #{tpu_custom_call.1} parent=11 // pred_check
          %p127 = pneg %p83
        $region18: #{tpu_custom_call.1} parent=11 // pred_check_branch
          %129 = sbr.rel (%p127) target = $region20
        $region19: #{tpu_custom_call.1} parent=11 // pred_region
          _
        $region20: #{tpu_custom_call.1} parent=11 // pred_fallthru
          _
      $region12: #{tpu_custom_call.1} parent=5 // pred_fallthru
        _
      %p130 = scmp.lt.s32.totalorder %s15, 2
      // Predicated region
      $region21: #{tpu_custom_call.1} parent=5 // pred_check
        %p131 = pneg %p130
      $region22: #{tpu_custom_call.1} parent=5 // pred_check_branch
        %133 = sbr.rel (%p131) target = $region24
      $region23: #{tpu_custom_call.1} parent=5 // pred_region
        // Predicated region
        $region25: #{tpu_custom_call.1} parent=23 // pred_check
          %p134 = pneg %p35
        $region26: #{tpu_custom_call.1} parent=23 // pred_check_branch
          %136 = sbr.rel (%p134) target = $region28
        $region27: #{tpu_custom_call.1} parent=23 // pred_region
          %s137 = sand.u32 %s25, 1
          %s138 = scalar_lea.sflag [#allocation3], %s137
          %s139 = sand.u32 %s25, 1
          %s140 = smul.addr %s139, 64
          %s141 = scalar_lea.vmem [#allocation2], %s140
          %s143 = ssub.s32 1024, 1024
          %144 = vsyncadd %s138, %s143
          %s145 = smul.addr %s15, 8
          %s146 = smul.addr %s145, 128
          %s147 = scalar_lea.hbm %s0, %s146
          %s148 = sshll.u32 %s141, 4
          %s149 = int_to_ptr.vmem [resolvable:$true] %s148
          %154 = dma.hbm_to_vmem [thread:$0]  %s147, 1024, %s149, %s138, 128, 128, 8
        $region28: #{tpu_custom_call.1} parent=23 // pred_fallthru
          _
      $region24: #{tpu_custom_call.1} parent=5 // pred_fallthru
        _
      %p155 = scmp.le.s32.totalorder 1, %s15
      %p156 = scmp.lt.s32.totalorder %s15, 3
      %p157 = pnand %p155, %p156
      %p158 = pneg %p157
      // Predicated region
      $region29: #{tpu_custom_call.1} parent=5 // pred_check
        _
      $region30: #{tpu_custom_call.1} parent=5 // pred_check_branch
        %160 = sbr.rel (%p157) target = $region32
      $region31: #{tpu_custom_call.1} parent=5 // pred_region
        %s161 = ssub.s32 %s15, 1
        %s162 = sand.u32 %s28, 1
        %s163 = scalar_lea.sflag [#allocation3], %s162
        %s164 = sand.u32 %s28, 1
        %s165 = smul.addr %s164, 64
        %s166 = scalar_lea.vmem [#allocation2], %s165
        // Predicated region
        $region33: #{tpu_custom_call.1} parent=31 // pred_check
          %p167 = pneg %p41
        $region34: #{tpu_custom_call.1} parent=31 // pred_check_branch
          %169 = sbr.rel (%p167) target = $region36
        $region35: #{tpu_custom_call.1} parent=31 // pred_region
          %170 = dma.done %s163, 1024
        $region36: #{tpu_custom_call.1} parent=31 // pred_fallthru
          _
        %s171 = sand.u32 %s28, 1
        %s172 = scalar_lea.sflag [#allocation3], %s171
        %s173 = sand.u32 %s28, 1
        %s174 = smul.addr %s173, 64
        %s175 = scalar_lea.vmem [#allocation2], %s174
        %p176 = pneg %p41
        %p177 = pneg %p38
        %p178 = pneg %p62
        %p179 = pneg %p59
        %p180 = pneg %p83
        %p181 = pneg %p80
        %p182 = pneg %p109
        %p183 = pneg %p106
        %s184 = sand.u32 %s96, 1
        %s185 = scalar_lea.sflag [#allocation4], %s184
        %s186 = sand.u32 %s96, 1
        %s187 = smul.addr %s186, 32
        %s188 = scalar_lea.vmem [#allocation5], %s187
        %v189 = vld [vmem:[%s166] sm:$0xff]
        %v190 = vld [vmem:[%s166 + $0x8] sm:$0xff]
        %v191 = vld [vmem:[%s166 + $0x10] sm:$0xff]
        %v192 = vld [vmem:[%s166 + $0x18] sm:$0xff]
        %v193 = vld [vmem:[%s166 + $0x20] sm:$0xff]
        %v194 = vld [vmem:[%s166 + $0x28] sm:$0xff]
        %v195 = vld [vmem:[%s166 + $0x30] sm:$0xff]
        %v196 = vld [vmem:[%s166 + $0x38] sm:$0xff]
        %v197 = vld [vmem:[%s1] sm:$0xff]
        %v198 = vld [vmem:[%s2] sm:$0xff]
        %v199 = vld [vmem:[%s2 + $0x8] sm:$0xff]
        %vm200 = vcmask 130048
        %v202 = vsel %vm200, %v197, 0
        %204 = vmatprep.subr.mxu0 0.0
        %205 = vmatpush1.msra.mxu0 0.0
        %206 = vmatprep.subr.mxu0 0.0
        %207 = vmatpush1.msra.mxu0 0.0
        %208 = vmatprep.subr.mxu0 0.0
        %209 = vmatpush1.msra.mxu0 0.0
        %210 = vmatprep.subr.mxu0 0.0
        %211 = vmatpush1.msra.mxu0 0.0
        %212 = vmatprep.subr.mxu0 0.0
        %213 = vmatpush1.msra.mxu0 0.0
        %214 = vmatprep.subr.mxu0 0.0
        %215 = vmatpush1.msra.mxu0 0.0
        %216 = vmatprep.subr.mxu0 0.0
        %217 = vmatpush1.msra.mxu0 0.0
        %218 = vmatprep.subr.mxu0 0.0
        %219 = vmatpush1.msra.mxu0 0.0
        %220 = vmatprep.subr.mxu0 0.0
        %221 = vmatpush1.msra.mxu0 0.0
        %222 = vmatprep.subr.mxu0 0.0
        %223 = vmatpush1.msra.mxu0 0.0
        %224 = vmatprep.subr.mxu0 0.0
        %225 = vmatpush1.msra.mxu0 0.0
        %226 = vmatprep.subr.mxu0 0.0
        %227 = vmatpush1.msra.mxu0 0.0
        %228 = vmatprep.subr.mxu0 0.0
        %229 = vmatpush1.msra.mxu0 0.0
        %230 = vmatprep.subr.mxu0 0.0
        %231 = vmatpush1.msra.mxu0 0.0
        %232 = vmatprep.subr.mxu0 0.0
        %233 = vmatpush1.msra.mxu0 %v190
        %234 = vmatprep.subr.mxu0 0.0
        %235 = vmatpush1.msra.mxu0 %v189
        %236 = vmatprep.subr.mxu0 0.0
        %237 = vmatpush2.msra.mxu0 0.0
        %238 = vmatprep.subr.mxu0 0.0
        %239 = vmatpush2.msra.mxu0 0.0
        %240 = vmatprep.subr.mxu0 0.0
        %241 = vmatpush2.msra.mxu0 0.0
        %242 = vmatprep.subr.mxu0 0.0
        %243 = vmatpush2.msra.mxu0 0.0
        %244 = vmatprep.subr.mxu0 0.0
        %245 = vmatpush2.msra.mxu0 0.0
        %246 = vmatprep.subr.mxu0 0.0
        %247 = vmatpush2.msra.mxu0 0.0
        %248 = vmatprep.subr.mxu0 0.0
        %249 = vmatpush2.msra.mxu0 0.0
        %250 = vmatprep.subr.mxu0 0.0
        %251 = vmatpush2.msra.mxu0 0.0
        %252 = vmatprep.subr.mxu0 0.0
        %253 = vmatpush2.msra.mxu0 0.0
        %254 = vmatprep.subr.mxu0 0.0
        %255 = vmatpush2.msra.mxu0 0.0
        %256 = vmatprep.subr.mxu0 0.0
        %257 = vmatpush2.msra.mxu0 0.0
        %258 = vmatprep.subr.mxu0 0.0
        %259 = vmatpush2.msra.mxu0 0.0
        %260 = vmatprep.subr.mxu0 0.0
        %261 = vmatpush2.msra.mxu0 0.0
        %262 = vmatprep.subr.mxu0 0.0
        %263 = vmatpush2.msra.mxu0 0.0
        %264 = vmatprep.subr.mxu0 0.0
        %265 = vmatpush2.msra.mxu0 0.0
        %266 = vmatprep.subr.mxu0 0.0
        %267 = vmatpush2.msra.mxu0 0.0
        %268 = vmatprep.mubr.f32.mxu0 0.0
        %269 = vmatmul.mubr.f32.gmra.mxu0 %v202
        %v270 = vpop.f32.mrf.mxu0
        %v271 = vadd.f32 0.0, %v270
        %v272 = vpop.f32.mrf.mxu0
        %273 = vdwg.mxu0
        %274 = vmatprep.subr.mxu0 0.0
        %275 = vmatpush1.msra.mxu0 0.0
        %276 = vmatprep.subr.mxu0 0.0
        %277 = vmatpush1.msra.mxu0 0.0
        %278 = vmatprep.subr.mxu0 0.0
        %279 = vmatpush1.msra.mxu0 0.0
        %280 = vmatprep.subr.mxu0 0.0
        %281 = vmatpush1.msra.mxu0 0.0
        %282 = vmatprep.subr.mxu0 0.0
        %283 = vmatpush1.msra.mxu0 0.0
        %284 = vmatprep.subr.mxu0 0.0
        %285 = vmatpush1.msra.mxu0 0.0
        %286 = vmatprep.subr.mxu0 0.0
        %287 = vmatpush1.msra.mxu0 0.0
        %288 = vmatprep.subr.mxu0 0.0
        %289 = vmatpush1.msra.mxu0 0.0
        %290 = vmatprep.subr.mxu0 0.0
        %291 = vmatpush1.msra.mxu0 0.0
        %292 = vmatprep.subr.mxu0 0.0
        %293 = vmatpush1.msra.mxu0 0.0
        %294 = vmatprep.subr.mxu0 0.0
        %295 = vmatpush1.msra.mxu0 0.0
        %296 = vmatprep.subr.mxu0 0.0
        %297 = vmatpush1.msra.mxu0 0.0
        %298 = vmatprep.subr.mxu0 0.0
        %299 = vmatpush1.msra.mxu0 0.0
        %300 = vmatprep.subr.mxu0 0.0
        %301 = vmatpush1.msra.mxu0 0.0
        %302 = vmatprep.subr.mxu0 0.0
        %303 = vmatpush1.msra.mxu0 %v192
        %304 = vmatprep.subr.mxu0 0.0
        %305 = vmatpush1.msra.mxu0 %v191
        %306 = vmatprep.subr.mxu0 0.0
        %307 = vmatpush2.msra.mxu0 0.0
        %308 = vmatprep.subr.mxu0 0.0
        %309 = vmatpush2.msra.mxu0 0.0
        %310 = vmatprep.subr.mxu0 0.0
        %311 = vmatpush2.msra.mxu0 0.0
        %312 = vmatprep.subr.mxu0 0.0
        %313 = vmatpush2.msra.mxu0 0.0
        %314 = vmatprep.subr.mxu0 0.0
        %315 = vmatpush2.msra.mxu0 0.0
        %316 = vmatprep.subr.mxu0 0.0
        %317 = vmatpush2.msra.mxu0 0.0
        %318 = vmatprep.subr.mxu0 0.0
        %319 = vmatpush2.msra.mxu0 0.0
        %320 = vmatprep.subr.mxu0 0.0
        %321 = vmatpush2.msra.mxu0 0.0
        %322 = vmatprep.subr.mxu0 0.0
        %323 = vmatpush2.msra.mxu0 0.0
        %324 = vmatprep.subr.mxu0 0.0
        %325 = vmatpush2.msra.mxu0 0.0
        %326 = vmatprep.subr.mxu0 0.0
        %327 = vmatpush2.msra.mxu0 0.0
        %328 = vmatprep.subr.mxu0 0.0
        %329 = vmatpush2.msra.mxu0 0.0
        %330 = vmatprep.subr.mxu0 0.0
        %331 = vmatpush2.msra.mxu0 0.0
        %332 = vmatprep.subr.mxu0 0.0
        %333 = vmatpush2.msra.mxu0 0.0
        %334 = vmatprep.subr.mxu0 0.0
        %335 = vmatpush2.msra.mxu0 0.0
        %336 = vmatprep.subr.mxu0 0.0
        %337 = vmatpush2.msra.mxu0 0.0
        %338 = vmatprep.mubr.f32.mxu0 0.0
        %339 = vmatmul.mubr.f32.gmra.mxu0 %v202
        %v340 = vpop.f32.mrf.mxu0
        %v341 = vadd.f32 0.0, %v340
        %v342 = vpop.f32.mrf.mxu0
        %343 = vdwg.mxu0
        %344 = vmatprep.subr.mxu0 0.0
        %345 = vmatpush1.msra.mxu0 0.0
        %346 = vmatprep.subr.mxu0 0.0
        %347 = vmatpush1.msra.mxu0 0.0
        %348 = vmatprep.subr.mxu0 0.0
        %349 = vmatpush1.msra.mxu0 0.0
        %350 = vmatprep.subr.mxu0 0.0
        %351 = vmatpush1.msra.mxu0 0.0
        %352 = vmatprep.subr.mxu0 0.0
        %353 = vmatpush1.msra.mxu0 0.0
        %354 = vmatprep.subr.mxu0 0.0
        %355 = vmatpush1.msra.mxu0 0.0
        %356 = vmatprep.subr.mxu0 0.0
        %357 = vmatpush1.msra.mxu0 0.0
        %358 = vmatprep.subr.mxu0 0.0
        %359 = vmatpush1.msra.mxu0 0.0
        %360 = vmatprep.subr.mxu0 0.0
        %361 = vmatpush1.msra.mxu0 0.0
        %362 = vmatprep.subr.mxu0 0.0
        %363 = vmatpush1.msra.mxu0 0.0
        %364 = vmatprep.subr.mxu0 0.0
        %365 = vmatpush1.msra.mxu0 0.0
        %366 = vmatprep.subr.mxu0 0.0
        %367 = vmatpush1.msra.mxu0 0.0
        %368 = vmatprep.subr.mxu0 0.0
        %369 = vmatpush1.msra.mxu0 0.0
        %370 = vmatprep.subr.mxu0 0.0
        %371 = vmatpush1.msra.mxu0 0.0
        %372 = vmatprep.subr.mxu0 0.0
        %373 = vmatpush1.msra.mxu0 %v194
        %374 = vmatprep.subr.mxu0 0.0
        %375 = vmatpush1.msra.mxu0 %v193
        %376 = vmatprep.subr.mxu0 0.0
        %377 = vmatpush2.msra.mxu0 0.0
        %378 = vmatprep.subr.mxu0 0.0
        %379 = vmatpush2.msra.mxu0 0.0
        %380 = vmatprep.subr.mxu0 0.0
        %381 = vmatpush2.msra.mxu0 0.0
        %382 = vmatprep.subr.mxu0 0.0
        %383 = vmatpush2.msra.mxu0 0.0
        %384 = vmatprep.subr.mxu0 0.0
        %385 = vmatpush2.msra.mxu0 0.0
        %386 = vmatprep.subr.mxu0 0.0
        %387 = vmatpush2.msra.mxu0 0.0
        %388 = vmatprep.subr.mxu0 0.0
        %389 = vmatpush2.msra.mxu0 0.0
        %390 = vmatprep.subr.mxu0 0.0
        %391 = vmatpush2.msra.mxu0 0.0
        %392 = vmatprep.subr.mxu0 0.0
        %393 = vmatpush2.msra.mxu0 0.0
        %394 = vmatprep.subr.mxu0 0.0
        %395 = vmatpush2.msra.mxu0 0.0
        %396 = vmatprep.subr.mxu0 0.0
        %397 = vmatpush2.msra.mxu0 0.0
        %398 = vmatprep.subr.mxu0 0.0
        %399 = vmatpush2.msra.mxu0 0.0
        %400 = vmatprep.subr.mxu0 0.0
        %401 = vmatpush2.msra.mxu0 0.0
        %402 = vmatprep.subr.mxu0 0.0
        %403 = vmatpush2.msra.mxu0 0.0
        %404 = vmatprep.subr.mxu0 0.0
        %405 = vmatpush2.msra.mxu0 0.0
        %406 = vmatprep.subr.mxu0 0.0
        %407 = vmatpush2.msra.mxu0 0.0
        %408 = vmatprep.mubr.f32.mxu0 0.0
        %409 = vmatmul.mubr.f32.gmra.mxu0 %v202
        %v410 = vpop.f32.mrf.mxu0
        %v411 = vadd.f32 0.0, %v410
        %v412 = vpop.f32.mrf.mxu0
        %413 = vdwg.mxu0
        %414 = vmatprep.subr.mxu0 0.0
        %415 = vmatpush1.msra.mxu0 0.0
        %416 = vmatprep.subr.mxu0 0.0
        %417 = vmatpush1.msra.mxu0 0.0
        %418 = vmatprep.subr.mxu0 0.0
        %419 = vmatpush1.msra.mxu0 0.0
        %420 = vmatprep.subr.mxu0 0.0
        %421 = vmatpush1.msra.mxu0 0.0
        %422 = vmatprep.subr.mxu0 0.0
        %423 = vmatpush1.msra.mxu0 0.0
        %424 = vmatprep.subr.mxu0 0.0
        %425 = vmatpush1.msra.mxu0 0.0
        %426 = vmatprep.subr.mxu0 0.0
        %427 = vmatpush1.msra.mxu0 0.0
        %428 = vmatprep.subr.mxu0 0.0
        %429 = vmatpush1.msra.mxu0 0.0
        %430 = vmatprep.subr.mxu0 0.0
        %431 = vmatpush1.msra.mxu0 0.0
        %432 = vmatprep.subr.mxu0 0.0
        %433 = vmatpush1.msra.mxu0 0.0
        %434 = vmatprep.subr.mxu0 0.0
        %435 = vmatpush1.msra.mxu0 0.0
        %436 = vmatprep.subr.mxu0 0.0
        %437 = vmatpush1.msra.mxu0 0.0
        %438 = vmatprep.subr.mxu0 0.0
        %439 = vmatpush1.msra.mxu0 0.0
        %440 = vmatprep.subr.mxu0 0.0
        %441 = vmatpush1.msra.mxu0 0.0
        %442 = vmatprep.subr.mxu0 0.0
        %443 = vmatpush1.msra.mxu0 %v196
        %444 = vmatprep.subr.mxu0 0.0
        %445 = vmatpush1.msra.mxu0 %v195
        %446 = vmatprep.subr.mxu0 0.0
        %447 = vmatpush2.msra.mxu0 0.0
        %448 = vmatprep.subr.mxu0 0.0
        %449 = vmatpush2.msra.mxu0 0.0
        %450 = vmatprep.subr.mxu0 0.0
        %451 = vmatpush2.msra.mxu0 0.0
        %452 = vmatprep.subr.mxu0 0.0
        %453 = vmatpush2.msra.mxu0 0.0
        %454 = vmatprep.subr.mxu0 0.0
        %455 = vmatpush2.msra.mxu0 0.0
        %456 = vmatprep.subr.mxu0 0.0
        %457 = vmatpush2.msra.mxu0 0.0
        %458 = vmatprep.subr.mxu0 0.0
        %459 = vmatpush2.msra.mxu0 0.0
        %460 = vmatprep.subr.mxu0 0.0
        %461 = vmatpush2.msra.mxu0 0.0
        %462 = vmatprep.subr.mxu0 0.0
        %463 = vmatpush2.msra.mxu0 0.0
        %464 = vmatprep.subr.mxu0 0.0
        %465 = vmatpush2.msra.mxu0 0.0
        %466 = vmatprep.subr.mxu0 0.0
        %467 = vmatpush2.msra.mxu0 0.0
        %468 = vmatprep.subr.mxu0 0.0
        %469 = vmatpush2.msra.mxu0 0.0
        %470 = vmatprep.subr.mxu0 0.0
        %471 = vmatpush2.msra.mxu0 0.0
        %472 = vmatprep.subr.mxu0 0.0
        %473 = vmatpush2.msra.mxu0 0.0
        %474 = vmatprep.subr.mxu0 0.0
        %475 = vmatpush2.msra.mxu0 0.0
        %476 = vmatprep.subr.mxu0 0.0
        %477 = vmatpush2.msra.mxu0 0.0
        %478 = vmatprep.mubr.f32.mxu0 0.0
        %479 = vmatmul.mubr.f32.gmra.mxu0 %v202
        %v480 = vpop.f32.mrf.mxu0
        %v481 = vadd.f32 0.0, %v480
        %v482 = vpop.f32.mrf.mxu0
        %483 = vdwg.mxu0
        %v485 = vsel %vm200, %v271, 0
        %487 = vmatprep.subr.mxu0 0.0
        %488 = vmatpush1.msra.mxu0 0.0
        %489 = vmatprep.subr.mxu0 0.0
        %490 = vmatpush1.msra.mxu0 0.0
        %491 = vmatprep.subr.mxu0 0.0
        %492 = vmatpush1.msra.mxu0 0.0
        %493 = vmatprep.subr.mxu0 0.0
        %494 = vmatpush1.msra.mxu0 0.0
        %495 = vmatprep.subr.mxu0 0.0
        %496 = vmatpush1.msra.mxu0 0.0
        %497 = vmatprep.subr.mxu0 0.0
        %498 = vmatpush1.msra.mxu0 0.0
        %499 = vmatprep.subr.mxu0 0.0
        %500 = vmatpush1.msra.mxu0 0.0
        %501 = vmatprep.subr.mxu0 0.0
        %502 = vmatpush1.msra.mxu0 0.0
        %503 = vmatprep.subr.mxu0 0.0
        %504 = vmatpush1.msra.mxu0 0.0
        %505 = vmatprep.subr.mxu0 0.0
        %506 = vmatpush1.msra.mxu0 0.0
        %507 = vmatprep.subr.mxu0 0.0
        %508 = vmatpush1.msra.mxu0 0.0
        %509 = vmatprep.subr.mxu0 0.0
        %510 = vmatpush1.msra.mxu0 0.0
        %511 = vmatprep.subr.mxu0 0.0
        %512 = vmatpush1.msra.mxu0 0.0
        %513 = vmatprep.subr.mxu0 0.0
        %514 = vmatpush1.msra.mxu0 0.0
        %515 = vmatprep.subr.mxu0 0.0
        %516 = vmatpush1.msra.mxu0 %v199
        %517 = vmatprep.subr.mxu0 0.0
        %518 = vmatpush1.msra.mxu0 %v198
        %519 = vmatprep.subr.mxu0 0.0
        %520 = vmatpush2.msra.mxu0 0.0
        %521 = vmatprep.subr.mxu0 0.0
        %522 = vmatpush2.msra.mxu0 0.0
        %523 = vmatprep.subr.mxu0 0.0
        %524 = vmatpush2.msra.mxu0 0.0
        %525 = vmatprep.subr.mxu0 0.0
        %526 = vmatpush2.msra.mxu0 0.0
        %527 = vmatprep.subr.mxu0 0.0
        %528 = vmatpush2.msra.mxu0 0.0
        %529 = vmatprep.subr.mxu0 0.0
        %530 = vmatpush2.msra.mxu0 0.0
        %531 = vmatprep.subr.mxu0 0.0
        %532 = vmatpush2.msra.mxu0 0.0
        %533 = vmatprep.subr.mxu0 0.0
        %534 = vmatpush2.msra.mxu0 0.0
        %535 = vmatprep.subr.mxu0 0.0
        %536 = vmatpush2.msra.mxu0 0.0
        %537 = vmatprep.subr.mxu0 0.0
        %538 = vmatpush2.msra.mxu0 0.0
        %539 = vmatprep.subr.mxu0 0.0
        %540 = vmatpush2.msra.mxu0 0.0
        %541 = vmatprep.subr.mxu0 0.0
        %542 = vmatpush2.msra.mxu0 0.0
        %543 = vmatprep.subr.mxu0 0.0
        %544 = vmatpush2.msra.mxu0 0.0
        %545 = vmatprep.subr.mxu0 0.0
        %546 = vmatpush2.msra.mxu0 0.0
        %547 = vmatprep.subr.mxu0 0.0
        %548 = vmatpush2.msra.mxu0 0.0
        %549 = vmatprep.subr.mxu0 0.0
        %550 = vmatpush2.msra.mxu0 0.0
        %551 = vmatprep.mubr.f32.mxu0 0.0
        %552 = vmatmul.mubr.f32.gmra.mxu0 %v485
        %v553 = vpop.f32.mrf.mxu0
        %v554 = vadd.f32 0.0, %v553
        %v555 = vpop.f32.mrf.mxu0
        %556 = vdwg.mxu0
        %v558 = vsel %vm200, %v341, 0
        %560 = vmatprep.subr.mxu0 0.0
        %561 = vmatpush1.msra.mxu0 0.0
        %562 = vmatprep.subr.mxu0 0.0
        %563 = vmatpush1.msra.mxu0 0.0
        %564 = vmatprep.subr.mxu0 0.0
        %565 = vmatpush1.msra.mxu0 0.0
        %566 = vmatprep.subr.mxu0 0.0
        %567 = vmatpush1.msra.mxu0 0.0
        %568 = vmatprep.subr.mxu0 0.0
        %569 = vmatpush1.msra.mxu0 0.0
        %570 = vmatprep.subr.mxu0 0.0
        %571 = vmatpush1.msra.mxu0 0.0
        %572 = vmatprep.subr.mxu0 0.0
        %573 = vmatpush1.msra.mxu0 0.0
        %574 = vmatprep.subr.mxu0 0.0
        %575 = vmatpush1.msra.mxu0 0.0
        %576 = vmatprep.subr.mxu0 0.0
        %577 = vmatpush1.msra.mxu0 0.0
        %578 = vmatprep.subr.mxu0 0.0
        %579 = vmatpush1.msra.mxu0 0.0
        %580 = vmatprep.subr.mxu0 0.0
        %581 = vmatpush1.msra.mxu0 0.0
        %582 = vmatprep.subr.mxu0 0.0
        %583 = vmatpush1.msra.mxu0 0.0
        %584 = vmatprep.subr.mxu0 0.0
        %585 = vmatpush1.msra.mxu0 0.0
        %586 = vmatprep.subr.mxu0 0.0
        %587 = vmatpush1.msra.mxu0 0.0
        %588 = vmatprep.subr.mxu0 0.0
        %589 = vmatpush1.msra.mxu0 %v199
        %590 = vmatprep.subr.mxu0 0.0
        %591 = vmatpush1.msra.mxu0 %v198
        %592 = vmatprep.subr.mxu0 0.0
        %593 = vmatpush2.msra.mxu0 0.0
        %594 = vmatprep.subr.mxu0 0.0
        %595 = vmatpush2.msra.mxu0 0.0
        %596 = vmatprep.subr.mxu0 0.0
        %597 = vmatpush2.msra.mxu0 0.0
        %598 = vmatprep.subr.mxu0 0.0
        %599 = vmatpush2.msra.mxu0 0.0
        %600 = vmatprep.subr.mxu0 0.0
        %601 = vmatpush2.msra.mxu0 0.0
        %602 = vmatprep.subr.mxu0 0.0
        %603 = vmatpush2.msra.mxu0 0.0
        %604 = vmatprep.subr.mxu0 0.0
        %605 = vmatpush2.msra.mxu0 0.0
        %606 = vmatprep.subr.mxu0 0.0
        %607 = vmatpush2.msra.mxu0 0.0
        %608 = vmatprep.subr.mxu0 0.0
        %609 = vmatpush2.msra.mxu0 0.0
        %610 = vmatprep.subr.mxu0 0.0
        %611 = vmatpush2.msra.mxu0 0.0
        %612 = vmatprep.subr.mxu0 0.0
        %613 = vmatpush2.msra.mxu0 0.0
        %614 = vmatprep.subr.mxu0 0.0
        %615 = vmatpush2.msra.mxu0 0.0
        %616 = vmatprep.subr.mxu0 0.0
        %617 = vmatpush2.msra.mxu0 0.0
        %618 = vmatprep.subr.mxu0 0.0
        %619 = vmatpush2.msra.mxu0 0.0
        %620 = vmatprep.subr.mxu0 0.0
        %621 = vmatpush2.msra.mxu0 0.0
        %622 = vmatprep.subr.mxu0 0.0
        %623 = vmatpush2.msra.mxu0 0.0
        %624 = vmatprep.mubr.f32.mxu0 0.0
        %625 = vmatmul.mubr.f32.gmra.mxu0 %v558
        %v626 = vpop.f32.mrf.mxu0
        %v627 = vadd.f32 0.0, %v626
        %v628 = vpop.f32.mrf.mxu0
        %629 = vdwg.mxu0
        %v631 = vsel %vm200, %v411, 0
        %633 = vmatprep.subr.mxu0 0.0
        %634 = vmatpush1.msra.mxu0 0.0
        %635 = vmatprep.subr.mxu0 0.0
        %636 = vmatpush1.msra.mxu0 0.0
        %637 = vmatprep.subr.mxu0 0.0
        %638 = vmatpush1.msra.mxu0 0.0
        %639 = vmatprep.subr.mxu0 0.0
        %640 = vmatpush1.msra.mxu0 0.0
        %641 = vmatprep.subr.mxu0 0.0
        %642 = vmatpush1.msra.mxu0 0.0
        %643 = vmatprep.subr.mxu0 0.0
        %644 = vmatpush1.msra.mxu0 0.0
        %645 = vmatprep.subr.mxu0 0.0
        %646 = vmatpush1.msra.mxu0 0.0
        %647 = vmatprep.subr.mxu0 0.0
        %648 = vmatpush1.msra.mxu0 0.0
        %649 = vmatprep.subr.mxu0 0.0
        %650 = vmatpush1.msra.mxu0 0.0
        %651 = vmatprep.subr.mxu0 0.0
        %652 = vmatpush1.msra.mxu0 0.0
        %653 = vmatprep.subr.mxu0 0.0
        %654 = vmatpush1.msra.mxu0 0.0
        %655 = vmatprep.subr.mxu0 0.0
        %656 = vmatpush1.msra.mxu0 0.0
        %657 = vmatprep.subr.mxu0 0.0
        %658 = vmatpush1.msra.mxu0 0.0
        %659 = vmatprep.subr.mxu0 0.0
        %660 = vmatpush1.msra.mxu0 0.0
        %661 = vmatprep.subr.mxu0 0.0
        %662 = vmatpush1.msra.mxu0 %v199
        %663 = vmatprep.subr.mxu0 0.0
        %664 = vmatpush1.msra.mxu0 %v198
        %665 = vmatprep.subr.mxu0 0.0
        %666 = vmatpush2.msra.mxu0 0.0
        %667 = vmatprep.subr.mxu0 0.0
        %668 = vmatpush2.msra.mxu0 0.0
        %669 = vmatprep.subr.mxu0 0.0
        %670 = vmatpush2.msra.mxu0 0.0
        %671 = vmatprep.subr.mxu0 0.0
        %672 = vmatpush2.msra.mxu0 0.0
        %673 = vmatprep.subr.mxu0 0.0
        %674 = vmatpush2.msra.mxu0 0.0
        %675 = vmatprep.subr.mxu0 0.0
        %676 = vmatpush2.msra.mxu0 0.0
        %677 = vmatprep.subr.mxu0 0.0
        %678 = vmatpush2.msra.mxu0 0.0
        %679 = vmatprep.subr.mxu0 0.0
        %680 = vmatpush2.msra.mxu0 0.0
        %681 = vmatprep.subr.mxu0 0.0
        %682 = vmatpush2.msra.mxu0 0.0
        %683 = vmatprep.subr.mxu0 0.0
        %684 = vmatpush2.msra.mxu0 0.0
        %685 = vmatprep.subr.mxu0 0.0
        %686 = vmatpush2.msra.mxu0 0.0
        %687 = vmatprep.subr.mxu0 0.0
        %688 = vmatpush2.msra.mxu0 0.0
        %689 = vmatprep.subr.mxu0 0.0
        %690 = vmatpush2.msra.mxu0 0.0
        %691 = vmatprep.subr.mxu0 0.0
        %692 = vmatpush2.msra.mxu0 0.0
        %693 = vmatprep.subr.mxu0 0.0
        %694 = vmatpush2.msra.mxu0 0.0
        %695 = vmatprep.subr.mxu0 0.0
        %696 = vmatpush2.msra.mxu0 0.0
        %697 = vmatprep.mubr.f32.mxu0 0.0
        %698 = vmatmul.mubr.f32.gmra.mxu0 %v631
        %v699 = vpop.f32.mrf.mxu0
        %v700 = vadd.f32 0.0, %v699
        %v701 = vpop.f32.mrf.mxu0
        %702 = vdwg.mxu0
        %v704 = vsel %vm200, %v481, 0
        %706 = vmatprep.subr.mxu0 0.0
        %707 = vmatpush1.msra.mxu0 0.0
        %708 = vmatprep.subr.mxu0 0.0
        %709 = vmatpush1.msra.mxu0 0.0
        %710 = vmatprep.subr.mxu0 0.0
        %711 = vmatpush1.msra.mxu0 0.0
        %712 = vmatprep.subr.mxu0 0.0
        %713 = vmatpush1.msra.mxu0 0.0
        %714 = vmatprep.subr.mxu0 0.0
        %715 = vmatpush1.msra.mxu0 0.0
        %716 = vmatprep.subr.mxu0 0.0
        %717 = vmatpush1.msra.mxu0 0.0
        %718 = vmatprep.subr.mxu0 0.0
        %719 = vmatpush1.msra.mxu0 0.0
        %720 = vmatprep.subr.mxu0 0.0
        %721 = vmatpush1.msra.mxu0 0.0
        %722 = vmatprep.subr.mxu0 0.0
        %723 = vmatpush1.msra.mxu0 0.0
        %724 = vmatprep.subr.mxu0 0.0
        %725 = vmatpush1.msra.mxu0 0.0
        %726 = vmatprep.subr.mxu0 0.0
        %727 = vmatpush1.msra.mxu0 0.0
        %728 = vmatprep.subr.mxu0 0.0
        %729 = vmatpush1.msra.mxu0 0.0
        %730 = vmatprep.subr.mxu0 0.0
        %731 = vmatpush1.msra.mxu0 0.0
        %732 = vmatprep.subr.mxu0 0.0
        %733 = vmatpush1.msra.mxu0 0.0
        %734 = vmatprep.subr.mxu0 0.0
        %735 = vmatpush1.msra.mxu0 %v199
        %736 = vmatprep.subr.mxu0 0.0
        %737 = vmatpush1.msra.mxu0 %v198
        %738 = vmatprep.subr.mxu0 0.0
        %739 = vmatpush2.msra.mxu0 0.0
        %740 = vmatprep.subr.mxu0 0.0
        %741 = vmatpush2.msra.mxu0 0.0
        %742 = vmatprep.subr.mxu0 0.0
        %743 = vmatpush2.msra.mxu0 0.0
        %744 = vmatprep.subr.mxu0 0.0
        %745 = vmatpush2.msra.mxu0 0.0
        %746 = vmatprep.subr.mxu0 0.0
        %747 = vmatpush2.msra.mxu0 0.0
        %748 = vmatprep.subr.mxu0 0.0
        %749 = vmatpush2.msra.mxu0 0.0
        %750 = vmatprep.subr.mxu0 0.0
        %751 = vmatpush2.msra.mxu0 0.0
        %752 = vmatprep.subr.mxu0 0.0
        %753 = vmatpush2.msra.mxu0 0.0
        %754 = vmatprep.subr.mxu0 0.0
        %755 = vmatpush2.msra.mxu0 0.0
        %756 = vmatprep.subr.mxu0 0.0
        %757 = vmatpush2.msra.mxu0 0.0
        %758 = vmatprep.subr.mxu0 0.0
        %759 = vmatpush2.msra.mxu0 0.0
        %760 = vmatprep.subr.mxu0 0.0
        %761 = vmatpush2.msra.mxu0 0.0
        %762 = vmatprep.subr.mxu0 0.0
        %763 = vmatpush2.msra.mxu0 0.0
        %764 = vmatprep.subr.mxu0 0.0
        %765 = vmatpush2.msra.mxu0 0.0
        %766 = vmatprep.subr.mxu0 0.0
        %767 = vmatpush2.msra.mxu0 0.0
        %768 = vmatprep.subr.mxu0 0.0
        %769 = vmatpush2.msra.mxu0 0.0
        %770 = vmatprep.mubr.f32.mxu0 0.0
        %771 = vmatmul.mubr.f32.gmra.mxu0 %v704
        %v772 = vpop.f32.mrf.mxu0
        %v773 = vadd.f32 0.0, %v772
        %v774 = vpop.f32.mrf.mxu0
        %775 = vdwg.mxu0
        %vm776 = vcmask 64512
        %777 = vst.msk [vmem:[%s188] sm:$0xff] %vm776, %v554
        %778 = vst.msk [vmem:[%s188 + $0x8] sm:$0xff] %vm776, %v627
        %779 = vst.msk [vmem:[%s188 + $0x10] sm:$0xff] %vm776, %v700
        %780 = vst.msk [vmem:[%s188 + $0x18] sm:$0xff] %vm776, %v773
        %s781 = sand.u32 %s96, 1
        %s782 = scalar_lea.sflag [#allocation4], %s781
        %s783 = sand.u32 %s96, 1
        %s784 = smul.addr %s783, 32
        %s785 = scalar_lea.vmem [#allocation5], %s784
        // Predicated region
        $region37: #{tpu_custom_call.1} parent=31 // pred_check
          %p786 = pneg %p106
        $region38: #{tpu_custom_call.1} parent=31 // pred_check_branch
          %788 = sbr.rel (%p786) target = $region40
        $region39: #{tpu_custom_call.1} parent=31 // pred_region
          %s790 = ssub.s32 512, 512
          %791 = vsyncadd %s782, %s790
          %s792 = smul.addr %s20, 4
          %s793 = smul.addr %s792, 128
          %s794 = scalar_lea.hbm %s3, %s793
          %s795 = sshll.u32 %s785, 4
          %s796 = int_to_ptr.vmem [resolvable:$true] %s795
          %801 = dma.vmem_to_hbm [thread:$0]  %s796, 512, %s794, %s782, 128, 128, 8
        $region40: #{tpu_custom_call.1} parent=31 // pred_fallthru
          _
      $region32: #{tpu_custom_call.1} parent=5 // pred_fallthru
        _
      %p802 = scmp.le.s32.totalorder 2, %s15
      // Predicated region
      $region41: #{tpu_custom_call.1} parent=5 // pred_check
        %p803 = pneg %p802
      $region42: #{tpu_custom_call.1} parent=5 // pred_check_branch
        %805 = sbr.rel (%p803) target = $region44
      $region43: #{tpu_custom_call.1} parent=5 // pred_region
        %s806 = ssub.s32 %s15, 2
        // Predicated region
        $region45: #{tpu_custom_call.1} parent=43 // pred_check
          %p807 = pneg %p112
        $region46: #{tpu_custom_call.1} parent=43 // pred_check_branch
          %809 = sbr.rel (%p807) target = $region48
        $region47: #{tpu_custom_call.1} parent=43 // pred_region
          %s810 = sand.u32 %s97, 1
          %s811 = scalar_lea.sflag [#allocation4], %s810
          %s812 = sand.u32 %s97, 1
          %s813 = smul.addr %s812, 32
          %s814 = scalar_lea.vmem [#allocation5], %s813
          %815 = dma.done %s811, 512
        $region48: #{tpu_custom_call.1} parent=43 // pred_fallthru
          _
      $region44: #{tpu_custom_call.1} parent=5 // pred_fallthru
        _
    $region6: #{tpu_custom_call.1} parent=1 // loop_footer
      %s19 = sadd.s32 1, %s15
    $region7: #{tpu_custom_call.1} parent=1 // loop_footer_branch
      %14 = sbr.rel target = $region3
    $region8: #{tpu_custom_call.1} parent=1 // loop_exit
      _
    %816 = vsyncpa [#allocation3], 1
    %s817 = scalar_lea.sflag [#allocation3], 1
    %818 = vsyncpa %s817, 1
    %819 = vsyncpa [#allocation4], 1
    %s820 = scalar_lea.sflag [#allocation4], 1
    %821 = vsyncpa %s820, 1

</llo_original>
